<compile_context>
chip_gen: v5e
topology: v5e:2x2
jax: 0.10.0
libtpu: 0.0.40
codegen_flags: <defaults>
</compile_context>

<pallas_src>
import math
from functools import partial

import jax
import jax.numpy as jnp
from jax.experimental import pallas as pl
from jax.experimental.pallas import tpu as pltpu


# ----------------------------- tiling helper -----------------------------

def _tile_m(M, target=512):
    """Largest row tile <= target that divides M (multiple of 8 when tiled)."""
    if M <= target:
        return M
    start = target - (target % 8)
    for t in range(start, 7, -8):
        if M % t == 0:
            return t
    return M


_PARALLEL1 = pltpu.CompilerParams(dimension_semantics=("parallel",))


# ----------------------------- Pallas kernels -----------------------------

def _proj_kernel(x_ref, w_ref, b_ref, o_ref):
    # fused (possibly concatenated) linear projection: o = x @ w + b
    o_ref[...] = (jnp.dot(x_ref[...], w_ref[...],
                          preferred_element_type=jnp.float32) + b_ref[...])


def fused_proj(x2d, w, b):
    # x2d: (M, Din), w: (Din, Dout), b: (1, Dout)
    M, Din = x2d.shape
    Dout = w.shape[1]
    tm = _tile_m(M)
    return pl.pallas_call(
        _proj_kernel,
        grid=(M // tm,),
        in_specs=[pl.BlockSpec((tm, Din), lambda i: (i, 0)),
                  pl.BlockSpec((Din, Dout), lambda i: (0, 0)),
                  pl.BlockSpec((1, Dout), lambda i: (0, 0))],
        out_specs=pl.BlockSpec((tm, Dout), lambda i: (i, 0)),
        out_shape=jax.ShapeDtypeStruct((M, Dout), jnp.float32),
        compiler_params=_PARALLEL1,
    )(x2d, w, b)


def _proj_add_ln_kernel(x_ref, w_ref, b_ref, r_ref, g_ref, be_ref, o_ref, *, eps):
    # out = LayerNorm(residual + (x @ w + b))
    y = jnp.dot(x_ref[...], w_ref[...], preferred_element_type=jnp.float32) + b_ref[...]
    s = r_ref[...] + y
    mu = jnp.mean(s, axis=-1, keepdims=True)
    var = jnp.mean((s - mu) ** 2, axis=-1, keepdims=True)   # biased, like torch LayerNorm
    o_ref[...] = (s - mu) * jax.lax.rsqrt(var + eps) * g_ref[...] + be_ref[...]


def proj_add_layernorm(x2d, w, b, resid2d, gamma, beta, eps=1e-6):
    M, Din = x2d.shape
    Dout = w.shape[1]
    tm = _tile_m(M)
    return pl.pallas_call(
        partial(_proj_add_ln_kernel, eps=eps),
        grid=(M // tm,),
        in_specs=[pl.BlockSpec((tm, Din), lambda i: (i, 0)),
                  pl.BlockSpec((Din, Dout), lambda i: (0, 0)),
                  pl.BlockSpec((1, Dout), lambda i: (0, 0)),
                  pl.BlockSpec((tm, Dout), lambda i: (i, 0)),
                  pl.BlockSpec((1, Dout), lambda i: (0, 0)),
                  pl.BlockSpec((1, Dout), lambda i: (0, 0))],
        out_specs=pl.BlockSpec((tm, Dout), lambda i: (i, 0)),
        out_shape=jax.ShapeDtypeStruct((M, Dout), jnp.float32),
        compiler_params=_PARALLEL1,
    )(x2d, w, b, resid2d, gamma, beta)


def _ffn_add_ln_kernel(x_ref, w1_ref, b1_ref, w2_ref, b2_ref, g_ref, be_ref, o_ref, *, eps):
    # out = LayerNorm(x + FFN(x)),  FFN(x) = relu(x@w1+b1)@w2+b2
    x = x_ref[...]
    h = jnp.dot(x, w1_ref[...], preferred_element_type=jnp.float32) + b1_ref[...]
    h = jnp.maximum(h, 0.0)  # ReLU
    y = jnp.dot(h, w2_ref[...], preferred_element_type=jnp.float32) + b2_ref[...]
    s = x + y
    mu = jnp.mean(s, axis=-1, keepdims=True)
    var = jnp.mean((s - mu) ** 2, axis=-1, keepdims=True)
    o_ref[...] = (s - mu) * jax.lax.rsqrt(var + eps) * g_ref[...] + be_ref[...]


def ffn_add_layernorm(x2d, w1, b1, w2, b2, gamma, beta, eps=1e-6):
    M, D = x2d.shape
    Dh = w1.shape[1]
    tm = _tile_m(M)
    return pl.pallas_call(
        partial(_ffn_add_ln_kernel, eps=eps),
        grid=(M // tm,),
        in_specs=[pl.BlockSpec((tm, D), lambda i: (i, 0)),
                  pl.BlockSpec((D, Dh), lambda i: (0, 0)),
                  pl.BlockSpec((1, Dh), lambda i: (0, 0)),
                  pl.BlockSpec((Dh, D), lambda i: (0, 0)),
                  pl.BlockSpec((1, D), lambda i: (0, 0)),
                  pl.BlockSpec((1, D), lambda i: (0, 0)),
                  pl.BlockSpec((1, D), lambda i: (0, 0))],
        out_specs=pl.BlockSpec((tm, D), lambda i: (i, 0)),
        out_shape=jax.ShapeDtypeStruct((M, D), jnp.float32),
        compiler_params=_PARALLEL1,
    )(x2d, w1, b1, w2, b2, gamma, beta)


def _attn_kernel(q_ref, k_ref, v_ref, m_ref, p_ref, o_ref, *, scale, num_head):
    # per-batch tile: q_ref (Sq,H,dk), k_ref/v_ref (Sk,H,dk), m_ref (Sq,Sk)
    # outputs: p_ref (H,Sq,Sk), o_ref (Sq,H,dk)  [head-minor layout -> free reshape to D]
    mask0 = m_ref[...] == 0.0
    for h in range(num_head):                       # static head unroll
        q = q_ref[:, h, :]                          # (Sq, dk)
        k = k_ref[:, h, :]                          # (Sk, dk)
        v = v_ref[:, h, :]                          # (Sk, dk)
        # contract last dims directly (no k.T relayout)
        s = jax.lax.dot_general(q, k, (((1,), (1,)), ((), ())),
                                preferred_element_type=jnp.float32) * scale
        s = jnp.where(mask0, -1e30, s)              # finite -> no NaN on fully-masked rows
        s = s - jnp.max(s, axis=-1, keepdims=True)
        e = jnp.exp(s)
        p = e / jnp.sum(e, axis=-1, keepdims=True)
        p_ref[h] = p
        o_ref[:, h, :] = jnp.dot(p, v, preferred_element_type=jnp.float32)


def attention_core(q, k, v, mask, scale):
    # q: (B,Sq,H,dk), k/v: (B,Sk,H,dk), mask: (B,Sq,Sk)
    B, Sq, H, dk = q.shape
    Sk = k.shape[1]
    return pl.pallas_call(
        partial(_attn_kernel, scale=scale, num_head=H),
        grid=(B,),
        in_specs=[pl.BlockSpec((None, Sq, H, dk), lambda b: (b, 0, 0, 0)),
                  pl.BlockSpec((None, Sk, H, dk), lambda b: (b, 0, 0, 0)),
                  pl.BlockSpec((None, Sk, H, dk), lambda b: (b, 0, 0, 0)),
                  pl.BlockSpec((None, Sq, Sk), lambda b: (b, 0, 0))],
        out_specs=[pl.BlockSpec((None, H, Sq, Sk), lambda b: (b, 0, 0, 0)),
                   pl.BlockSpec((None, Sq, H, dk), lambda b: (b, 0, 0, 0))],
        out_shape=[jax.ShapeDtypeStruct((B, H, Sq, Sk), jnp.float32),
                   jax.ShapeDtypeStruct((B, Sq, H, dk), jnp.float32)],
        compiler_params=pltpu.CompilerParams(dimension_semantics=("parallel",)),
    )(q, k, v, mask)


# ----------------------------- module glue (plain JAX) -----------------------------

def self_attention_block(p, x, mask, num_head, gamma, beta, eps=1e-6):
    # fused QKV projection + attention + fused(output-proj + residual + LayerNorm)
    B, S, D = x.shape
    dk = D // num_head
    x2d = x.reshape(B * S, D)
    qkv = fused_proj(x2d, p["w_qkv"], p["b_qkv"])              # (B*S, 3D)
    qkv5 = qkv.reshape(B, S, 3, num_head, dk)                  # free reshape
    q, k, v = qkv5[:, :, 0], qkv5[:, :, 1], qkv5[:, :, 2]      # (B,S,H,dk)
    scale = 1.0 / math.sqrt(D)                                 # torch: 1/sqrt(emb_dim)
    prob, attn = attention_core(q, k, v, mask, scale)
    new_x = proj_add_layernorm(attn.reshape(B * S, D), p["wo"], p["bo"],
                               x2d, gamma, beta, eps).reshape(B, S, D)
    return prob, new_x


def cross_attention_block(p, x, enc, mask, num_head, gamma, beta, eps=1e-6):
    B, Sq, D = x.shape
    Sk = enc.shape[1]
    dk = D // num_head
    x2d = x.reshape(B * Sq, D)
    q = fused_proj(x2d, p["wq"], p["bq"]).reshape(B, Sq, num_head, dk)
    kv = fused_proj(enc.reshape(B * Sk, D), p["w_kv"], p["b_kv"])     # (B*Sk, 2D)
    kv5 = kv.reshape(B, Sk, 2, num_head, dk)
    k, v = kv5[:, :, 0], kv5[:, :, 1]
    scale = 1.0 / math.sqrt(D)
    prob, attn = attention_core(q, k, v, mask, scale)
    new_x = proj_add_layernorm(attn.reshape(B * Sq, D), p["wo"], p["bo"],
                               x2d, gamma, beta, eps).reshape(B, Sq, D)
    return prob, new_x


def decoder_layer(params, x, enc_output, dec_mask, enc_mask, num_head):
    B, S, D = x.shape
    g, be = params["ln_gamma"], params["ln_beta"]     # same LayerNorm reused 3x
    eps = 1e-6
    # TODO(synk): dropout is eval-mode identity only.

    # 1) masked self-attention + residual + LN (residual/LN fused into out-proj kernel)
    dec_prob, x = self_attention_block(params["self_attn"], x, dec_mask,
                                       num_head, g, be, eps)
    # 2) enc-dec attention + residual + LN
    dec_enc_prob, x = cross_attention_block(params["cross_attn"], x, enc_output, enc_mask,
                                            num_head, g, be, eps)
    # 3) position-wise FFN + residual + LN (single fused kernel)
    x = ffn_add_layernorm(x.reshape(B * S, D),
                          params["ffn_w1"], params["ffn_b1"],
                          params["ffn_w2"], params["ffn_b2"],
                          g, be, eps).reshape(B, S, D)
    return dec_prob, dec_enc_prob, x


# ----------------------------- deterministic params -----------------------------

def init_linear(key, d_in, d_out):
    k1, k2 = jax.random.split(key)
    bound = 1.0 / math.sqrt(d_in)
    w = jax.random.uniform(k1, (d_out, d_in), jnp.float32, -bound, bound)   # torch (out,in)
    b = jax.random.uniform(k2, (1, d_out), jnp.float32, -bound, bound)
    return w.T, b    # store as (in,out) for right-multiplication in the kernel


def init_attn(key, D):
    ks = jax.random.split(key, 4)
    wq, bq = init_linear(ks[0], D, D)
    wk, bk = init_linear(ks[1], D, D)
    wv, bv = init_linear(ks[2], D, D)
    wo, bo = init_linear(ks[3], D, D)
    return dict(wq=wq, bq=bq, wk=wk, bk=bk, wv=wv, bv=bv, wo=wo, bo=bo,
                # pre-concatenated fused projection weights
                w_qkv=jnp.concatenate([wq, wk, wv], axis=1),
                b_qkv=jnp.concatenate([bq, bk, bv], axis=1),
                w_kv=jnp.concatenate([wk, wv], axis=1),
                b_kv=jnp.concatenate([bk, bv], axis=1))


def init_params(key, D):
    ks = jax.random.split(key, 4)
    w1, b1 = init_linear(ks[2], D, 4 * D)
    w2, b2 = init_linear(ks[3], 4 * D, D)
    return dict(self_attn=init_attn(ks[0], D),
                cross_attn=init_attn(ks[1], D),
                ffn_w1=w1, ffn_b1=b1, ffn_w2=w2, ffn_b2=b2,
                ln_gamma=jnp.ones((1, D), jnp.float32),
                ln_beta=jnp.zeros((1, D), jnp.float32))


# ----------------------------- pure-JAX reference (sanity check) -----------------------------

def ref_mha(p, q_in, k_in, v_in, mask, num_head):
    B, Sq, D = q_in.shape
    Sk = k_in.shape[1]
    dk = D // num_head
    q = (q_in @ p["wq"] + p["bq"]).reshape(B, Sq, num_head, dk).transpose(0, 2, 1, 3)
    k = (k_in @ p["wk"] + p["bk"]).reshape(B, Sk, num_head, dk).transpose(0, 2, 1, 3)
    v = (v_in @ p["wv"] + p["bv"]).reshape(B, Sk, num_head, dk).transpose(0, 2, 1, 3)
    s = jnp.einsum("bhqd,bhkd->bhqk", q, k) / math.sqrt(D)
    s = jnp.where(mask[:, None] == 0, -jnp.inf, s)
    prob = jax.nn.softmax(s, axis=-1)
    o = jnp.einsum("bhqk,bhkd->bhqd", prob, v).transpose(0, 2, 1, 3).reshape(B, Sq, D)
    return prob, o @ p["wo"] + p["bo"]


def ref_ln(x, g, b, eps=1e-6):
    mu = jnp.mean(x, -1, keepdims=True)
    var = jnp.mean((x - mu) ** 2, -1, keepdims=True)
    return (x - mu) * jax.lax.rsqrt(var + eps) * g + b


def ref_decoder(params, x, enc, dm, em, num_head):
    g, be = params["ln_gamma"], params["ln_beta"]
    p1, o = ref_mha(params["self_attn"], x, x, x, dm, num_head)
    x = ref_ln(x + o, g, be)
    p2, o = ref_mha(params["cross_attn"], x, enc, enc, em, num_head)
    x = ref_ln(x + o, g, be)
    h = jnp.maximum(x @ params["ffn_w1"] + params["ffn_b1"], 0.0)
    o = h @ params["ffn_w2"] + params["ffn_b2"]
    x = ref_ln(x + o, g, be)
    return p1, p2, x


# ----------------------------- main -----------------------------

if __name__ == "__main__":
    B, S_dec, S_enc, D, H = 2, 8, 16, 32, 4

    key = jax.random.PRNGKey(0)
    k_p, k_x, k_e = jax.random.split(key, 3)
    params = init_params(k_p, D)

    x = jax.random.normal(k_x, (B, S_dec, D), jnp.float32)
    enc_output = jax.random.normal(k_e, (B, S_enc, D), jnp.float32)
    # causal decoder mask (B, Sq, Sq); full encoder mask (B, Sq, S_enc)
    dec_mask = jnp.broadcast_to(jnp.tril(jnp.ones((S_dec, S_dec), jnp.float32)),
                                (B, S_dec, S_dec))
    enc_mask = jnp.ones((B, S_dec, S_enc), jnp.float32)

    dec_prob, dec_enc_prob, out = decoder_layer(params, x, enc_output,
                                                dec_mask, enc_mask, H)
    jax.block_until_ready((dec_prob, dec_enc_prob, out))

    # sanity check against pure-JAX reference
    rp1, rp2, rout = ref_decoder(params, x, enc_output, dec_mask, enc_mask, H)
    assert dec_prob.shape == (B, H, S_dec, S_dec)
    assert dec_enc_prob.shape == (B, H, S_dec, S_enc)
    assert out.shape == (B, S_dec, D)
    assert jnp.allclose(dec_prob, rp1, atol=1e-5, rtol=1e-5)
    assert jnp.allclose(dec_enc_prob, rp2, atol=1e-5, rtol=1e-5)
    assert jnp.allclose(out, rout, atol=1e-4, rtol=1e-4)

    print("KERNEL_OK")
</pallas_src>

<mosaic_0001>
module attributes {stable_mosaic.version = 11 : i64} {
  func.func @_proj_kernel(%arg0: i32, %arg1: memref<16x32xf32, #tpu.memory_space<vmem>>, %arg2: memref<32x96xf32, #tpu.memory_space<vmem>>, %arg3: memref<1x96xf32, #tpu.memory_space<vmem>>, %arg4: memref<16x96xf32, #tpu.memory_space<vmem>>) attributes {dimension_semantics = [#tpu.dimension_semantics<parallel>], iteration_bounds = array<i64: 1>, scalar_prefetch = 0 : i64, scratch_operands = 0 : i64, tpu.core_type = #tpu.core_type<tc>, window_params = [{transform_indices = @transform_0, window_bounds = array<i64: 16, 32>}, {pipeline_mode = #tpu.pipeline_mode<synchronous>, transform_indices = @transform_1, window_bounds = array<i64: 32, 96>}, {pipeline_mode = #tpu.pipeline_mode<synchronous>, transform_indices = @transform_2, window_bounds = array<i64: 1, 96>}, {transform_indices = @transform_3, window_bounds = array<i64: 16, 96>}]} {
    %c0 = arith.constant 0 : index
    %c0_0 = arith.constant 0 : index
    %0 = vector.load %arg1[%c0, %c0_0] : memref<16x32xf32, #tpu.memory_space<vmem>>, vector<16x32xf32>
    %c0_1 = arith.constant 0 : index
    %c0_2 = arith.constant 0 : index
    %1 = vector.load %arg2[%c0_1, %c0_2] : memref<32x96xf32, #tpu.memory_space<vmem>>, vector<32x96xf32>
    %cst = arith.constant dense<0.000000e+00> : vector<16x96xf32>
    %2 = tpu.matmul %0, %1, %cst {dimension_numbers = #tpu.dot_dimension_numbers<[1], [0], [0], [1], [0, 0, 1, 1], [], []>} : vector<16x32xf32>, vector<32x96xf32>, vector<16x96xf32> -> vector<16x96xf32>
    %c0_3 = arith.constant 0 : index
    %c0_4 = arith.constant 0 : index
    %3 = vector.load %arg3[%c0_3, %c0_4] : memref<1x96xf32, #tpu.memory_space<vmem>>, vector<1x96xf32>
    %4 = vector.broadcast %3 : vector<1x96xf32> to vector<16x96xf32>
    %5 = arith.addf %2, %4 : vector<16x96xf32>
    %c0_5 = arith.constant 0 : index
    %c0_6 = arith.constant 0 : index
    %6 = vector.load %arg4[%c0_5, %c0_6] : memref<16x96xf32, #tpu.memory_space<vmem>>, vector<16x96xf32>
    tpu.vector_store %arg4[%c0_5, %c0_6], %5 {strides = array<i32>} : memref<16x96xf32, #tpu.memory_space<vmem>>, vector<16x96xf32>,
    return
  }
  func.func @transform_0(%arg0: i32) -> (i32, i32) {
    %c0_i32 = arith.constant 0 : i32
    %c0_i32_0 = arith.constant 0 : i32
    return %arg0, %c0_i32 : i32, i32
  }
  func.func @transform_1(%arg0: i32) -> (i32, i32) {
    %c0_i32 = arith.constant 0 : i32
    %c0_i32_0 = arith.constant 0 : i32
    %c0_i32_1 = arith.constant 0 : i32
    return %c0_i32, %c0_i32_0 : i32, i32
  }
  func.func @transform_2(%arg0: i32) -> (i32, i32) {
    %c0_i32 = arith.constant 0 : i32
    %c0_i32_0 = arith.constant 0 : i32
    %c0_i32_1 = arith.constant 0 : i32
    return %c0_i32, %c0_i32_0 : i32, i32
  }
  func.func @transform_3(%arg0: i32) -> (i32, i32) {
    %c0_i32 = arith.constant 0 : i32
    %c0_i32_0 = arith.constant 0 : i32
    return %arg0, %c0_i32 : i32, i32
  }
}

</mosaic_0001>

<llo_original>
// kernel: tpu_custom_call.1
$region0: #{tpu_custom_call.1}
  #allocation0 [shape = 'u32[]', space=smem, size = 0x4, offset = 0x4, fixed_abs, tag = 'smem constant byte address 0x4 - core index']
  #allocation1 [shape = 'u32[72,128]{1,0:T(1,128)}', space=vmem, size = 0x9000, scoped, tag = 'internal scratch']
  %s0 = inlined_call_operand.hbm [shape: f32[16,32], index: 0, kind: input, shape index: {}]
  %s1 = inlined_call_operand.hbm [shape: f32[32,96], index: 1, kind: input, shape index: {}]
  %s2 = inlined_call_operand.vmem [shape: f32[1,96], index: 2, kind: input, shape index: {}]
  %s3 = inlined_call_operand.hbm [shape: f32[16,96], index: 3, kind: output, shape index: {}]
  %s4 = sld [smem:[#allocation0]]
  $region30: #{tpu_custom_call.1} parent=0
    _
  %s6 = ssub.s32 1, %s4
  %s7 = scalar_select 0, %s6, %s4
  $region1: #{tpu_custom_call.1} parent=0
    #allocation2 [shape = 'u8[8192]{0}', space=vmem, size = 0x2000, scoped, tag = 'input window, operand 0, single buffered']
    #allocation3 [shape = 's32[1]{0}', space=sflag, size = 0x4, scoped, tag = 'scoped memory for tpu_custom_call.1']
    #allocation4 [shape = 's32[1]{0}', space=sflag, size = 0x4, scoped, tag = 'scoped memory for tpu_custom_call.1']
    #allocation5 [shape = 'u8[16384]{0}', space=vmem, size = 0x4000, scoped, tag = 'input window, operand 1, single buffered']
    #allocation6 [shape = 's32[1]{0}', space=sflag, size = 0x4, scoped, tag = 'scoped memory for tpu_custom_call.1']
    #allocation7 [shape = 'u8[8192]{0}', space=vmem, size = 0x2000, scoped, tag = 'output window, operand 0, single buffered']
    %8 = vsyncpa [#allocation3], 0
    %9 = vsyncpa [#allocation6], 0
    %10 = vsyncpa [#allocation4], 0
    // Predicated region
    $region2: #{tpu_custom_call.1} parent=1 // pred_check
      _
    $region3: #{tpu_custom_call.1} parent=1 // pred_check_branch
      %12 = sbr.rel (0) target = $region5
    $region4: #{tpu_custom_call.1} parent=1 // pred_region
      %14 = vsyncadd [#allocation3], 0
      %s15 = sshll.u32 %s0, 4
      %s16 = int_to_ptr.hbm [resolvable:$true] %s15
      %s17 = sshll.u32 [#allocation2], 4
      %s18 = int_to_ptr.vmem [resolvable:$true] %s17
      %23 = dma.hbm_to_vmem [thread:$0]  %s16, 256, %s18, [#allocation3], 128, 128, 8
    $region5: #{tpu_custom_call.1} parent=1 // pred_fallthru
      _
    // Predicated region
    $region6: #{tpu_custom_call.1} parent=1 // pred_check
      _
    $region7: #{tpu_custom_call.1} parent=1 // pred_check_branch
      %25 = sbr.rel (0) target = $region9
    $region8: #{tpu_custom_call.1} parent=1 // pred_region
      %27 = vsyncadd [#allocation6], 0
      %s28 = sshll.u32 %s1, 4
      %s29 = int_to_ptr.hbm [resolvable:$true] %s28
      %s30 = sshll.u32 [#allocation5], 4
      %s31 = int_to_ptr.vmem [resolvable:$true] %s30
      %36 = dma.hbm_to_vmem [thread:$0]  %s29, 512, %s31, [#allocation6], 128, 128, 8
    $region9: #{tpu_custom_call.1} parent=1 // pred_fallthru
      _
    // Predicated region
    $region10: #{tpu_custom_call.1} parent=1 // pred_check
      _
    $region11: #{tpu_custom_call.1} parent=1 // pred_check_branch
      %38 = sbr.rel (0) target = $region13
    $region12: #{tpu_custom_call.1} parent=1 // pred_region
      _
    $region13: #{tpu_custom_call.1} parent=1 // pred_fallthru
      _
    // Predicated region
    $region14: #{tpu_custom_call.1} parent=1 // pred_check
      _
    $region15: #{tpu_custom_call.1} parent=1 // pred_check_branch
      %40 = sbr.rel (0) target = $region17
    $region16: #{tpu_custom_call.1} parent=1 // pred_region
      %42 = dma.done [#allocation3], 256
    $region17: #{tpu_custom_call.1} parent=1 // pred_fallthru
      _
    // Predicated region
    $region18: #{tpu_custom_call.1} parent=1 // pred_check
      _
    $region19: #{tpu_custom_call.1} parent=1 // pred_check_branch
      %44 = sbr.rel (0) target = $region21
    $region20: #{tpu_custom_call.1} parent=1 // pred_region
      %46 = dma.done [#allocation6], 512
    $region21: #{tpu_custom_call.1} parent=1 // pred_fallthru
      _
    %v47 = vld [vmem:[#allocation2] sm:$0xff]
    %v48 = vld [vmem:[#allocation2 + $0x8] sm:$0xff]
    %v49 = vld [vmem:[#allocation5] sm:$0xff]
    %v50 = vld [vmem:[#allocation5 + $0x8] sm:$0xff]
    %v51 = vld [vmem:[#allocation5 + $0x10] sm:$0xff]
    %v52 = vld [vmem:[#allocation5 + $0x18] sm:$0xff]
    %v53 = vld [vmem:[%s2] sm:$0x1]
    %v55 = vperm.slane %v53, 0
    %vm57 = vcmask 261120
    %v59 = vsel %vm57, %v47, 0
    %v62 = vsel %vm57, %v48, 0
    %64 = vmatpush.msra.mxu0 0.0
    %65 = vmatpush.msra.mxu0 0.0
    %66 = vmatpush.msra.mxu0 0.0
    %67 = vmatpush.msra.mxu0 0.0
    %68 = vmatpush.msra.mxu0 0.0
    %69 = vmatpush.msra.mxu0 0.0
    %70 = vmatpush.msra.mxu0 0.0
    %71 = vmatpush.msra.mxu0 0.0
    %72 = vmatpush.msra.mxu0 0.0
    %73 = vmatpush.msra.mxu0 0.0
    %74 = vmatpush.msra.mxu0 0.0
    %75 = vmatpush.msra.mxu0 0.0
    %76 = vmatpush.msra.mxu0 %v52
    %77 = vmatpush.msra.mxu0 %v51
    %78 = vmatpush.msra.mxu0 %v50
    %79 = vmatpush.msra.mxu0 %v49
    %80 = vmatmul.f32.gmra.mxu0 %v59
    %v81 = vpop.f32.mrf.mxu0
    %v82 = vadd.f32 %v55, %v81
    %83 = vmatmul.f32.gmra.mxu0 %v62
    %v84 = vpop.f32.mrf.mxu0
    %v85 = vadd.f32 %v55, %v84
    %86 = vdwg.mxu0
    %vm87 = vcmask 785408
    %88 = vst.msk [vmem:[#allocation7] sm:$0xff] %vm87, %v82
    %89 = vst.msk [vmem:[#allocation7 + $0x8] sm:$0xff] %vm87, %v85
    // Predicated region
    $region22: #{tpu_custom_call.1} parent=1 // pred_check
      _
    $region23: #{tpu_custom_call.1} parent=1 // pred_check_branch
      %91 = sbr.rel (0) target = $region25
    $region24: #{tpu_custom_call.1} parent=1 // pred_region
      %93 = vsyncadd [#allocation4], 0
      %s94 = sshll.u32 [#allocation7], 4
      %s95 = int_to_ptr.vmem [resolvable:$true] %s94
      %s96 = sshll.u32 %s3, 4
      %s97 = int_to_ptr.hbm [resolvable:$true] %s96
      %102 = dma.vmem_to_hbm [thread:$0]  %s95, 256, %s97, [#allocation4], 128, 128, 8
    $region25: #{tpu_custom_call.1} parent=1 // pred_fallthru
      _
    // Predicated region
    $region26: #{tpu_custom_call.1} parent=1 // pred_check
      _
    $region27: #{tpu_custom_call.1} parent=1 // pred_check_branch
      %104 = sbr.rel (0) target = $region29
    $region28: #{tpu_custom_call.1} parent=1 // pred_region
      %106 = dma.done [#allocation4], 256
    $region29: #{tpu_custom_call.1} parent=1 // pred_fallthru
      _
    %107 = vsyncpa [#allocation3], 1
    %108 = vsyncpa [#allocation6], 1
    %109 = vsyncpa [#allocation4], 1

</llo_original>
